<compile_context>
chip_gen: v7x
topology: tpu7x:2x2x1
jax: 0.10.0
libtpu: 0.0.40
codegen_flags: <defaults>
</compile_context>

<pallas_src>
import jax
import jax.numpy as jnp
from jax.experimental import pallas as pl
from jax.experimental.pallas import tpu as pltpu


def _div_kernel(x_ref, y_ref, o_ref):
    # Elementwise exact division on the whole VMEM tile (VPU path).
    o_ref[...] = x_ref[...] / y_ref[...]


# Below this many (padded) elements, a single gridless VMEM block is used.
_SMALL_THRESHOLD_ELEMS = 512 * 1024  # 2 MiB of f32 per operand


def _pad_flat(flat, target_len, pad_value):
    n = flat.shape[0]
    if target_len == n:
        return flat
    pad = jnp.full((target_len - n,), pad_value, dtype=flat.dtype)
    return jnp.concatenate([flat, pad])


def matrix_div(x, y):
    """Elementwise x / y, matching torch.div semantics for same-shape inputs."""
    assert x.shape == y.shape, "kernel assumes same-shape operands (no broadcast)"
    orig_shape = x.shape
    dtype = x.dtype
    n = x.size

    xf = x.reshape(-1)
    yf = y.reshape(-1)

    itemsize = jnp.dtype(dtype).itemsize
    cost = pl.CostEstimate(
        flops=n, transcendentals=0, bytes_accessed=3 * n * itemsize
    )

    LANES = 128
    SUBLANES = 8

    if n <= _SMALL_THRESHOLD_ELEMS:
        # ---- Small path: one gridless block, everything resident in VMEM. ----
        # Pad up to a full (8, 128) tile so the VPU / store path stays dense
        # (no masked partial stores, no sublane waste).
        tile_elems = SUBLANES * LANES
        padded_n = -(-n // tile_elems) * tile_elems
        xf_p = _pad_flat(xf, padded_n, 0)
        yf_p = _pad_flat(yf, padded_n, 1)  # pad denominator with 1 (no div-by-0)
        rows = padded_n // LANES
        x2 = xf_p.reshape(rows, LANES)
        y2 = yf_p.reshape(rows, LANES)

        out2 = pl.pallas_call(
            _div_kernel,
            out_shape=jax.ShapeDtypeStruct((rows, LANES), dtype),
            in_specs=[
                pl.BlockSpec(memory_space=pltpu.MemorySpace.VMEM),
                pl.BlockSpec(memory_space=pltpu.MemorySpace.VMEM),
            ],
            out_specs=pl.BlockSpec(memory_space=pltpu.MemorySpace.VMEM),
            cost_estimate=cost,
        )(x2, y2)

        return out2.reshape(-1)[:n].reshape(orig_shape)

    # ---- Large path: row-tiled grid, double-buffered HBM streaming. ----
    COLS = 1024          # lane-dense output (large multiple of 128)
    TR = 512             # (512, 1024) f32 block = 2 MiB per operand per buffer
    block_elems = TR * COLS
    padded_n = -(-n // block_elems) * block_elems
    xf_p = _pad_flat(xf, padded_n, 0)
    yf_p = _pad_flat(yf, padded_n, 1)
    rows = padded_n // COLS
    x2 = xf_p.reshape(rows, COLS)
    y2 = yf_p.reshape(rows, COLS)
    grid = (rows // TR,)

    out2 = pl.pallas_call(
        _div_kernel,
        out_shape=jax.ShapeDtypeStruct((rows, COLS), dtype),
        grid=grid,
        in_specs=[
            pl.BlockSpec((TR, COLS), lambda i: (i, 0)),
            pl.BlockSpec((TR, COLS), lambda i: (i, 0)),
        ],
        out_specs=pl.BlockSpec((TR, COLS), lambda i: (i, 0)),
        compiler_params=pltpu.CompilerParams(
            dimension_semantics=("parallel",),
            vmem_limit_bytes=32 * 1024 * 1024,  # 6 live 2 MiB buffers << 64 MiB (v7x)
        ),
        cost_estimate=cost,
    )(x2, y2)

    return out2.reshape(-1)[:n].reshape(orig_shape)


if __name__ == "__main__":
    key = jax.random.PRNGKey(0)
    kx, ky = jax.random.split(key)
    shape = (2, 4, 16, 16)  # NCHW, as in the ONNX test
    x = jax.random.normal(kx, shape, dtype=jnp.float32)
    # keep denominator away from zero
    y = jax.random.normal(ky, shape, dtype=jnp.float32) + 2.5

    z = matrix_div(x, y)
    jax.block_until_ready(z)

    ref = x / y
    assert z.shape == shape
    assert jnp.allclose(z, ref, atol=1e-6, rtol=1e-6)
    print("KERNEL_OK")
</pallas_src>

<mosaic_0001>
module attributes {stable_mosaic.version = 11 : i64} {
  func.func @_div_kernel(%arg0: memref<16x128xf32, #tpu.memory_space<vmem>>, %arg1: memref<16x128xf32, #tpu.memory_space<vmem>>, %arg2: memref<16x128xf32, #tpu.memory_space<vmem>>) attributes {dimension_semantics = [], scalar_prefetch = 0 : i64, scratch_operands = 0 : i64, tpu.core_type = #tpu.core_type<tc>} {
    %c0 = arith.constant 0 : index
    %c0_0 = arith.constant 0 : index
    %0 = vector.load %arg0[%c0, %c0_0] : memref<16x128xf32, #tpu.memory_space<vmem>>, vector<16x128xf32>
    %c0_1 = arith.constant 0 : index
    %c0_2 = arith.constant 0 : index
    %1 = vector.load %arg1[%c0_1, %c0_2] : memref<16x128xf32, #tpu.memory_space<vmem>>, vector<16x128xf32>
    %2 = arith.divf %0, %1 : vector<16x128xf32>
    %c0_3 = arith.constant 0 : index
    %c0_4 = arith.constant 0 : index
    %3 = vector.load %arg2[%c0_3, %c0_4] : memref<16x128xf32, #tpu.memory_space<vmem>>, vector<16x128xf32>
    tpu.vector_store %arg2[%c0_3, %c0_4], %2 {strides = array<i32>} : memref<16x128xf32, #tpu.memory_space<vmem>>, vector<16x128xf32>,
    return
  }
}

</mosaic_0001>

<llo_original>
// kernel: tpu_custom_call.1
$region0: #{tpu_custom_call.1}
  #allocation0 [shape = 'u32[]', space=smem, size = 0x4, offset = 0x4, fixed_abs, tag = 'smem constant byte address 0x4 - core index']
  #allocation1 [shape = 'u32[144,128]{1,0:T(1,128)}', space=vmem, size = 0x12000, scoped, tag = 'internal scratch']
  %s0 = inlined_call_operand.hbm [shape: f32[16,128], index: 0, kind: input, shape index: {}]
  %s1 = inlined_call_operand.hbm [shape: f32[16,128], index: 1, kind: input, shape index: {}]
  %s2 = inlined_call_operand.hbm [shape: f32[16,128], index: 2, kind: output, shape index: {}]
  %s3 = sld [smem:[#allocation0]]
  $region26: #{tpu_custom_call.1} parent=0
    _
  %s5 = ssub.s32 1, %s3
  %s6 = scalar_select 0, %s5, %s3
  $region1: #{tpu_custom_call.1} parent=0
    #allocation2 [shape = 'u8[8192]{0}', space=vmem, size = 0x2000, scoped, tag = 'input window, operand 0, single buffered']
    #allocation3 [shape = 's32[1]{0}', space=sflag, size = 0x4, scoped, tag = 'scoped memory for tpu_custom_call.1']
    #allocation4 [shape = 's32[1]{0}', space=sflag, size = 0x4, scoped, tag = 'scoped memory for tpu_custom_call.1']
    #allocation5 [shape = 'u8[8192]{0}', space=vmem, size = 0x2000, scoped, tag = 'input window, operand 1, single buffered']
    #allocation6 [shape = 's32[1]{0}', space=sflag, size = 0x4, scoped, tag = 'scoped memory for tpu_custom_call.1']
    #allocation7 [shape = 'u8[8192]{0}', space=vmem, size = 0x2000, scoped, tag = 'output window, operand 0, single buffered']
    %7 = vsyncpa [#allocation3], 0
    %8 = vsyncpa [#allocation6], 0
    %9 = vsyncpa [#allocation4], 0
    // Predicated region
    $region2: #{tpu_custom_call.1} parent=1 // pred_check
      _
    $region3: #{tpu_custom_call.1} parent=1 // pred_check_branch
      %11 = sbr.rel (0) target = $region5
    $region4: #{tpu_custom_call.1} parent=1 // pred_region
      %s13 = ssub.s32 256, 256
      %14 = vsyncadd [#allocation3], %s13
      %s15 = sshll.u32 [#allocation2], 4
      %s16 = int_to_ptr.vmem [resolvable:$true] %s15
      %21 = dma.hbm_to_vmem [thread:$0]  %s0, 256, %s16, [#allocation3], 128, 128, 8
    $region5: #{tpu_custom_call.1} parent=1 // pred_fallthru
      _
    // Predicated region
    $region6: #{tpu_custom_call.1} parent=1 // pred_check
      _
    $region7: #{tpu_custom_call.1} parent=1 // pred_check_branch
      %23 = sbr.rel (0) target = $region9
    $region8: #{tpu_custom_call.1} parent=1 // pred_region
      %s25 = ssub.s32 256, 256
      %26 = vsyncadd [#allocation6], %s25
      %s27 = sshll.u32 [#allocation5], 4
      %s28 = int_to_ptr.vmem [resolvable:$true] %s27
      %33 = dma.hbm_to_vmem [thread:$0]  %s1, 256, %s28, [#allocation6], 128, 128, 8
    $region9: #{tpu_custom_call.1} parent=1 // pred_fallthru
      _
    // Predicated region
    $region10: #{tpu_custom_call.1} parent=1 // pred_check
      _
    $region11: #{tpu_custom_call.1} parent=1 // pred_check_branch
      %35 = sbr.rel (0) target = $region13
    $region12: #{tpu_custom_call.1} parent=1 // pred_region
      %36 = dma.done [#allocation3], 256
    $region13: #{tpu_custom_call.1} parent=1 // pred_fallthru
      _
    // Predicated region
    $region14: #{tpu_custom_call.1} parent=1 // pred_check
      _
    $region15: #{tpu_custom_call.1} parent=1 // pred_check_branch
      %38 = sbr.rel (0) target = $region17
    $region16: #{tpu_custom_call.1} parent=1 // pred_region
      %39 = dma.done [#allocation6], 256
    $region17: #{tpu_custom_call.1} parent=1 // pred_fallthru
      _
    %v40 = vld [vmem:[#allocation2] sm:$0xff]
    %v41 = vld [vmem:[#allocation2 + $0x8] sm:$0xff]
    %v42 = vld [vmem:[#allocation5] sm:$0xff]
    %v43 = vld [vmem:[#allocation5 + $0x8] sm:$0xff]
    %v44 = vrcp.pop %v42
    %v45 = vmul.f32 %v40, %v44
    %v46 = vrcp.pop %v43
    %v47 = vmul.f32 %v41, %v46
    %48 = vst [vmem:[#allocation7] sm:$0xff] %v45
    %49 = vst [vmem:[#allocation7 + $0x8] sm:$0xff] %v47
    // Predicated region
    $region18: #{tpu_custom_call.1} parent=1 // pred_check
      _
    $region19: #{tpu_custom_call.1} parent=1 // pred_check_branch
      %51 = sbr.rel (0) target = $region21
    $region20: #{tpu_custom_call.1} parent=1 // pred_region
      %s53 = ssub.s32 256, 256
      %54 = vsyncadd [#allocation4], %s53
      %s55 = sshll.u32 [#allocation7], 4
      %s56 = int_to_ptr.vmem [resolvable:$true] %s55
      %61 = dma.vmem_to_hbm [thread:$0]  %s56, 256, %s2, [#allocation4], 128, 128, 8
    $region21: #{tpu_custom_call.1} parent=1 // pred_fallthru
      _
    // Predicated region
    $region22: #{tpu_custom_call.1} parent=1 // pred_check
      _
    $region23: #{tpu_custom_call.1} parent=1 // pred_check_branch
      %63 = sbr.rel (0) target = $region25
    $region24: #{tpu_custom_call.1} parent=1 // pred_region
      %64 = dma.done [#allocation4], 256
    $region25: #{tpu_custom_call.1} parent=1 // pred_fallthru
      _
    %65 = vsyncpa [#allocation3], 1
    %66 = vsyncpa [#allocation6], 1
    %67 = vsyncpa [#allocation4], 1

</llo_original>
